<compile_context>
chip_gen: v7x
topology: tpu7x:2x2x1
jax: 0.10.0
libtpu: 0.0.40
codegen_flags: <defaults>
</compile_context>

<pallas_src>
import math

import jax
import jax.numpy as jnp
from jax.experimental import pallas as pl
from jax.experimental.pallas import tpu as pltpu

NUM_HEADS = 8
OUT_PAD = 128  # lane-dense output width (>= real out_dim, multiple of 128)


# ----------------------------------------------------------------------------
# Kernel: out[i, :] = x[i, :] @ Wx + y[i, :] @ Wy + bias   (Wx, Wy pre-folded)
# ----------------------------------------------------------------------------
def _cross_attention_kernel(x_ref, y_ref, wx_ref, wy_ref, b_ref, out_ref):
    # bf16 (or f32) operands on the MXU, f32 accumulation.  Bias add stays f32.
    x = x_ref[...].astype(wx_ref.dtype)
    y = y_ref[...].astype(wy_ref.dtype)
    acc = jnp.dot(x, wx_ref[...], preferred_element_type=jnp.float32)
    acc = acc + jnp.dot(y, wy_ref[...], preferred_element_type=jnp.float32)
    out_ref[...] = (acc + b_ref[...]).astype(out_ref.dtype)


# ----------------------------------------------------------------------------
# One-time host-side weight folding (NOT on the per-call path).
# ----------------------------------------------------------------------------
def prepare_params(params, *, out_pad=OUT_PAD, compute_dtype=jnp.bfloat16):
    """Fold Wv -> out_proj -> fc into two (E, out_pad) matrices + one f32 bias row.

    Valid because seq_len == 1 => softmax over a single key == 1 => attn == V exactly.
    """
    in_proj_w = params["in_proj_w"]                  # (3E, E), torch layout
    e = in_proj_w.shape[1]
    assert e % NUM_HEADS == 0, "embed_dim must be divisible by num_heads"
    out_dim = params["fc_w"].shape[0]
    assert out_dim <= out_pad

    wv = in_proj_w[2 * e:]                           # (E, E)
    bv = params["in_proj_b"][2 * e:]                 # (E,)
    wo = params["out_proj_w"]                        # (E, E)
    bo = params["out_proj_b"]                        # (E,)
    fc_w = params["fc_w"]                            # (out_dim, 2E)
    fc_b = params["fc_b"]                            # (out_dim,)

    w_vo = wv.T @ wo.T                               # (E, E)   v-proj -> out_proj
    b_vo = bv @ wo.T + bo                            # (E,)
    wfc1 = fc_w[:, :e].T                             # (E, out_dim) multiplies mri_pet (from y)
    wfc2 = fc_w[:, e:].T                             # (E, out_dim) multiplies pet_mri (from x)

    w_y = w_vo @ wfc1                                # (E, out_dim)
    w_x = w_vo @ wfc2                                # (E, out_dim)
    bias = b_vo @ (wfc1 + wfc2) + fc_b               # (out_dim,)

    pad2d = ((0, 0), (0, out_pad - out_dim))
    return dict(
        w_x=jnp.pad(w_x, pad2d).astype(compute_dtype),
        w_y=jnp.pad(w_y, pad2d).astype(compute_dtype),
        bias=jnp.pad(bias, (0, out_pad - out_dim)).reshape(1, out_pad).astype(jnp.float32),
        out_dim=out_dim,
    )


# ----------------------------------------------------------------------------
# Forward: mirrors CrossAttention.forward, returns (x, y, output).
# ----------------------------------------------------------------------------
def cross_attention_forward(x, y, prepped, *, tile_n=512):
    n, e = x.shape
    out_pad = prepped["w_x"].shape[1]
    out_dim = prepped["out_dim"]

    tile_n = min(tile_n, n)
    tile_n = max(8, (tile_n // 8) * 8)               # f32 sublane multiple
    grid = (pl.cdiv(n, tile_n),)                     # partial last tile OK: rows independent

    wbytes = prepped["w_x"].dtype.itemsize
    cost = pl.CostEstimate(
        flops=4 * n * e * out_pad,                   # two (n,e)x(e,out_pad) matmuls
        transcendentals=0,
        bytes_accessed=(2 * n * e * x.dtype.itemsize
                        + 2 * e * out_pad * wbytes
                        + out_pad * 4
                        + n * out_pad * 4),
    )

    out = pl.pallas_call(
        _cross_attention_kernel,
        out_shape=jax.ShapeDtypeStruct((n, out_pad), jnp.float32),
        grid_spec=pltpu.PrefetchScalarGridSpec(
            num_scalar_prefetch=0,
            grid=grid,
            in_specs=[
                pl.BlockSpec((tile_n, e), lambda i: (i, 0)),       # x rows
                pl.BlockSpec((tile_n, e), lambda i: (i, 0)),       # y rows
                pl.BlockSpec((e, out_pad), lambda i: (0, 0)),      # folded Wx (resident)
                pl.BlockSpec((e, out_pad), lambda i: (0, 0)),      # folded Wy (resident)
                pl.BlockSpec((1, out_pad), lambda i: (0, 0)),      # folded bias (resident)
            ],
            out_specs=pl.BlockSpec((tile_n, out_pad), lambda i: (i, 0)),
        ),
        compiler_params=pltpu.CompilerParams(
            dimension_semantics=("parallel",),       # row tiles split across TCs on v7x
        ),
        cost_estimate=cost,
    )(x, y, prepped["w_x"], prepped["w_y"], prepped["bias"])

    # Lane-dense kernel output; the real (tiny) out_dim is sliced in XLA.
    return x, y, out[:, :out_dim]


# ----------------------------------------------------------------------------
# Pure-JAX reference implementing the exact torch MHA math (full softmax path).
# ----------------------------------------------------------------------------
def _reference(x, y, params):
    e = x.shape[1]
    hd = e // NUM_HEADS

    def mha(q_in, kv_in):
        wq = params["in_proj_w"][:e]
        wk = params["in_proj_w"][e:2 * e]
        wv = params["in_proj_w"][2 * e:]
        bq = params["in_proj_b"][:e]
        bk = params["in_proj_b"][e:2 * e]
        bv = params["in_proj_b"][2 * e:]
        q = q_in @ wq.T + bq
        k = kv_in @ wk.T + bk
        v = kv_in @ wv.T + bv
        qh = q.reshape(-1, NUM_HEADS, hd)
        kh = k.reshape(-1, NUM_HEADS, hd)
        vh = v.reshape(-1, NUM_HEADS, hd)
        s = jnp.sum(qh * kh, axis=-1) / math.sqrt(hd)            # (N, H)
        w = jax.nn.softmax(s[..., None], axis=-1)                # softmax over 1 key == 1
        attn = (w * vh).reshape(-1, e)
        return attn @ params["out_proj_w"].T + params["out_proj_b"]

    cat = jnp.concatenate([mha(x, y), mha(y, x)], axis=1)
    return cat @ params["fc_w"].T + params["fc_b"]


if __name__ == "__main__":
    N, E, OUT_DIM = 256, 64, 2                       # small shapes; E % 8 == 0
    key = jax.random.PRNGKey(0)
    ks = jax.random.split(key, 8)
    x = jax.random.normal(ks[0], (N, E), jnp.float32)
    y = jax.random.normal(ks[1], (N, E), jnp.float32)

    # Deterministic synthetic params matching nn.MultiheadAttention / nn.Linear shapes.
    params = dict(
        in_proj_w=jax.random.normal(ks[2], (3 * E, E), jnp.float32) * 0.05,
        in_proj_b=jax.random.normal(ks[3], (3 * E,), jnp.float32) * 0.05,
        out_proj_w=jax.random.normal(ks[4], (E, E), jnp.float32) * 0.05,
        out_proj_b=jax.random.normal(ks[5], (E,), jnp.float32) * 0.05,
        fc_w=jax.random.normal(ks[6], (OUT_DIM, 2 * E), jnp.float32) * 0.05,
        fc_b=jax.random.normal(ks[7], (OUT_DIM,), jnp.float32) * 0.05,
    )

    ref = _reference(x, y, params)

    # bf16 MXU-operand path (production setting), tile_n=128 -> 2 grid steps exercised.
    prepped_bf16 = prepare_params(params)            # one-time weight folding
    x_out, y_out, out = cross_attention_forward(x, y, prepped_bf16, tile_n=128)
    jax.block_until_ready(out)
    assert out.shape == (N, OUT_DIM)
    assert jnp.allclose(out, ref, atol=5e-3, rtol=5e-2), "bf16 kernel mismatch vs reference"
    assert x_out is x and y_out is y                 # inputs passed through untouched

    # f32-operand path: tight check that the folded math is exact.
    prepped_f32 = prepare_params(params, compute_dtype=jnp.float32)
    _, _, out_f32 = cross_attention_forward(x, y, prepped_f32, tile_n=128)
    jax.block_until_ready(out_f32)
    assert jnp.allclose(out_f32, ref, atol=1e-4, rtol=1e-4), "f32 kernel mismatch vs reference"

    print("KERNEL_OK")
</pallas_src>

<mosaic_0001>
module attributes {stable_mosaic.version = 11 : i64} {
  func.func @_cross_attention_kernel(%arg0: i32, %arg1: memref<128x64xf32, #tpu.memory_space<vmem>>, %arg2: memref<128x64xf32, #tpu.memory_space<vmem>>, %arg3: memref<64x128xbf16, #tpu.memory_space<vmem>>, %arg4: memref<64x128xbf16, #tpu.memory_space<vmem>>, %arg5: memref<1x128xf32, #tpu.memory_space<vmem>>, %arg6: memref<128x128xf32, #tpu.memory_space<vmem>>) attributes {dimension_semantics = [#tpu.dimension_semantics<parallel>], iteration_bounds = array<i64: 2>, scalar_prefetch = 0 : i64, scratch_operands = 0 : i64, tpu.core_type = #tpu.core_type<tc>, window_params = [{transform_indices = @transform_0, window_bounds = array<i64: 128, 64>}, {transform_indices = @transform_1, window_bounds = array<i64: 128, 64>}, {pipeline_mode = #tpu.pipeline_mode<synchronous>, transform_indices = @transform_2, window_bounds = array<i64: 64, 128>}, {pipeline_mode = #tpu.pipeline_mode<synchronous>, transform_indices = @transform_3, window_bounds = array<i64: 64, 128>}, {pipeline_mode = #tpu.pipeline_mode<synchronous>, transform_indices = @transform_4, window_bounds = array<i64: 1, 128>}, {transform_indices = @transform_5, window_bounds = array<i64: 128, 128>}]} {
    %c0 = arith.constant 0 : index
    %c0_0 = arith.constant 0 : index
    %0 = vector.load %arg1[%c0, %c0_0] : memref<128x64xf32, #tpu.memory_space<vmem>>, vector<128x64xf32>
    %1 = arith.truncf %0 : vector<128x64xf32> to vector<128x64xbf16>
    %c0_1 = arith.constant 0 : index
    %c0_2 = arith.constant 0 : index
    %2 = vector.load %arg2[%c0_1, %c0_2] : memref<128x64xf32, #tpu.memory_space<vmem>>, vector<128x64xf32>
    %3 = arith.truncf %2 : vector<128x64xf32> to vector<128x64xbf16>
    %c0_3 = arith.constant 0 : index
    %c0_4 = arith.constant 0 : index
    %4 = vector.load %arg3[%c0_3, %c0_4] : memref<64x128xbf16, #tpu.memory_space<vmem>>, vector<64x128xbf16>
    %cst = arith.constant dense<0.000000e+00> : vector<128x128xf32>
    %5 = tpu.matmul %1, %4, %cst {dimension_numbers = #tpu.dot_dimension_numbers<[1], [0], [0], [1], [0, 0, 1, 1], [], []>} : vector<128x64xbf16>, vector<64x128xbf16>, vector<128x128xf32> -> vector<128x128xf32>
    %c0_5 = arith.constant 0 : index
    %c0_6 = arith.constant 0 : index
    %6 = vector.load %arg4[%c0_5, %c0_6] : memref<64x128xbf16, #tpu.memory_space<vmem>>, vector<64x128xbf16>
    %cst_7 = arith.constant dense<0.000000e+00> : vector<128x128xf32>
    %7 = tpu.matmul %3, %6, %cst_7 {dimension_numbers = #tpu.dot_dimension_numbers<[1], [0], [0], [1], [0, 0, 1, 1], [], []>} : vector<128x64xbf16>, vector<64x128xbf16>, vector<128x128xf32> -> vector<128x128xf32>
    %8 = arith.addf %5, %7 : vector<128x128xf32>
    %c0_8 = arith.constant 0 : index
    %c0_9 = arith.constant 0 : index
    %9 = vector.load %arg5[%c0_8, %c0_9] : memref<1x128xf32, #tpu.memory_space<vmem>>, vector<1x128xf32>
    %10 = vector.broadcast %9 : vector<1x128xf32> to vector<128x128xf32>
    %11 = arith.addf %8, %10 : vector<128x128xf32>
    %c0_10 = arith.constant 0 : index
    %c0_11 = arith.constant 0 : index
    %12 = vector.load %arg6[%c0_10, %c0_11] : memref<128x128xf32, #tpu.memory_space<vmem>>, vector<128x128xf32>
    tpu.vector_store %arg6[%c0_10, %c0_11], %11 {strides = array<i32>} : memref<128x128xf32, #tpu.memory_space<vmem>>, vector<128x128xf32>,
    return
  }
  func.func @transform_0(%arg0: i32) -> (i32, i32) {
    %c0_i32 = arith.constant 0 : i32
    %c0_i32_0 = arith.constant 0 : i32
    return %arg0, %c0_i32 : i32, i32
  }
  func.func @transform_1(%arg0: i32) -> (i32, i32) {
    %c0_i32 = arith.constant 0 : i32
    %c0_i32_0 = arith.constant 0 : i32
    return %arg0, %c0_i32 : i32, i32
  }
  func.func @transform_2(%arg0: i32) -> (i32, i32) {
    %c0_i32 = arith.constant 0 : i32
    %c0_i32_0 = arith.constant 0 : i32
    %c0_i32_1 = arith.constant 0 : i32
    return %c0_i32, %c0_i32_0 : i32, i32
  }
  func.func @transform_3(%arg0: i32) -> (i32, i32) {
    %c0_i32 = arith.constant 0 : i32
    %c0_i32_0 = arith.constant 0 : i32
    %c0_i32_1 = arith.constant 0 : i32
    return %c0_i32, %c0_i32_0 : i32, i32
  }
  func.func @transform_4(%arg0: i32) -> (i32, i32) {
    %c0_i32 = arith.constant 0 : i32
    %c0_i32_0 = arith.constant 0 : i32
    %c0_i32_1 = arith.constant 0 : i32
    return %c0_i32, %c0_i32_0 : i32, i32
  }
  func.func @transform_5(%arg0: i32) -> (i32, i32) {
    %c0_i32 = arith.constant 0 : i32
    %c0_i32_0 = arith.constant 0 : i32
    return %arg0, %c0_i32 : i32, i32
  }
}

</mosaic_0001>

<llo_original>
// kernel: tpu_custom_call.1
$region0: #{tpu_custom_call.1}
  #allocation0 [shape = 'u32[]', space=smem, size = 0x4, offset = 0x4, fixed_abs, tag = 'smem constant byte address 0x4 - core index']
  #allocation1 [shape = 'u32[144,128]{1,0:T(1,128)}', space=vmem, size = 0x12000, scoped, tag = 'internal scratch']
  %s0 = inlined_call_operand.vmem [shape: f32[256,64], index: 0, kind: input, shape index: {}]
  %s1 = inlined_call_operand.vmem [shape: f32[256,64], index: 1, kind: input, shape index: {}]
  %s2 = inlined_call_operand.vmem [shape: bf16[64,128], index: 2, kind: input, shape index: {}]
  %s3 = inlined_call_operand.vmem [shape: bf16[64,128], index: 3, kind: input, shape index: {}]
  %s4 = inlined_call_operand.vmem [shape: f32[1,128], index: 4, kind: input, shape index: {}]
  %s5 = inlined_call_operand.hbm [shape: f32[256,128], index: 5, kind: output, shape index: {}]
  %s6 = sld [smem:[#allocation0]]
  $region53: #{tpu_custom_call.1} parent=0
    _
  %s8 = ssub.s32 1, %s6
  %s9 = scalar_select 0, %s8, %s6
  $region1: #{tpu_custom_call.1} parent=0
    #allocation2 [shape = 'u8[131072]{0}', space=vmem, size = 0x20000, scoped, tag = 'output window, operand 0']
    #allocation3 [shape = 's32[2]{0}', space=sflag, size = 0x8, scoped, tag = 'scoped memory for tpu_custom_call.1']
    %10 = vsyncpa [#allocation3], 0
    %s11 = scalar_lea.sflag [#allocation3], 1
    %12 = vsyncpa %s11, 0
    loop: start=0, step=1, limit=4
    $region2: #{tpu_custom_call.1} parent=1 // loop_pre_header
      _
    $region3: #{tpu_custom_call.1} parent=1 // loop_header
      %s14 = sphi 0, %s18
      %p15 = scmp.ge.s32.totalorder %s14, 4
      %s24 = sphi 0, %s26
      %s27 = sphi 0, %s24
      %s28 = sphi 0, %s27
      %s44 = sphi 0, %s28
      %s50 = sphi 0, %s52
      %s53 = sphi 0, %s50
      %s54 = sphi 0, %s53
      %s70 = sphi 0, %s54
      %s74 = sphi 0, %s74
      %s76 = sphi 0, %s74
      %s77 = sphi 0, %s76
      %s91 = sphi 0, %s77
      %s95 = sphi 0, %s95
      %s97 = sphi 0, %s95
      %s98 = sphi 0, %s97
      %s112 = sphi 0, %s98
      %s116 = sphi 0, %s116
      %s118 = sphi 0, %s116
      %s119 = sphi 0, %s118
      %s133 = sphi 0, %s119
      %s139 = sphi 0, %s141
      %s142 = sphi 0, %s139
      %s143 = sphi 0, %s142
      %s159 = sphi 0, %s143
    $region4: #{tpu_custom_call.1} parent=1 // loop_header_branch
      %17 = sbr.rel (%p15) target = $region8
    $region5: #{tpu_custom_call.1} parent=1 // loop_body
      %s19 = ssub.s32 %s14, 1
      %s20 = ssub.s32 %s14, 2
      %s21 = sadd.s32 %s14, 1
      %s22 = ssub.s32 %s14, %s21
      %p23 = scmp.eq.s32.totalorder %s22, 0
      %s25 = sadd.s32 %s24, 1
      %s26 = scalar_select %p23, %s24, %s25
      %p29 = pneg %p23
      %p30 = scmp.eq.s32.totalorder %s14, 1
      %p31 = por %p29, %p30
      %p32 = scmp.ne.s32.totalorder %s24, %s27
      %p33 = scmp.eq.s32.totalorder %s14, 0
      %p34 = por %p32, %p33
      %p35 = scmp.ne.s32.totalorder %s24, %s27
      %p36 = scmp.eq.s32.totalorder %s19, 1
      %p37 = por %p35, %p36
      %p38 = scmp.ne.s32.totalorder %s27, %s28
      %p39 = scmp.eq.s32.totalorder %s19, 0
      %p40 = por %p38, %p39
      %p41 = scmp.ne.s32.totalorder %s27, %s28
      %p42 = scmp.eq.s32.totalorder %s20, 1
      %p43 = por %p41, %p42
      %p45 = scmp.ne.s32.totalorder %s28, %s44
      %p46 = scmp.eq.s32.totalorder %s20, 0
      %p47 = por %p45, %p46
      %s48 = ssub.s32 %s14, %s21
      %p49 = scmp.eq.s32.totalorder %s48, 0
      %s51 = sadd.s32 %s50, 1
      %s52 = scalar_select %p49, %s50, %s51
      %p55 = pneg %p49
      %p56 = scmp.eq.s32.totalorder %s14, 1
      %p57 = por %p55, %p56
      %p58 = scmp.ne.s32.totalorder %s50, %s53
      %p59 = scmp.eq.s32.totalorder %s14, 0
      %p60 = por %p58, %p59
      %p61 = scmp.ne.s32.totalorder %s50, %s53
      %p62 = scmp.eq.s32.totalorder %s19, 1
      %p63 = por %p61, %p62
      %p64 = scmp.ne.s32.totalorder %s53, %s54
      %p65 = scmp.eq.s32.totalorder %s19, 0
      %p66 = por %p64, %p65
      %p67 = scmp.ne.s32.totalorder %s53, %s54
      %p68 = scmp.eq.s32.totalorder %s20, 1
      %p69 = por %p67, %p68
      %p71 = scmp.ne.s32.totalorder %s54, %s70
      %p72 = scmp.eq.s32.totalorder %s20, 0
      %p73 = por %p71, %p72
      %s75 = sadd.s32 %s74, 1
      %p78 = scmp.eq.s32.totalorder %s14, 1
      %p79 = scmp.ne.s32.totalorder %s74, %s76
      %p80 = scmp.eq.s32.totalorder %s14, 0
      %p81 = por %p79, %p80
      %p82 = scmp.ne.s32.totalorder %s74, %s76
      %p83 = scmp.eq.s32.totalorder %s19, 1
      %p84 = por %p82, %p83
      %p85 = scmp.ne.s32.totalorder %s76, %s77
      %p86 = scmp.eq.s32.totalorder %s19, 0
      %p87 = por %p85, %p86
      %p88 = scmp.ne.s32.totalorder %s76, %s77
      %p89 = scmp.eq.s32.totalorder %s20, 1
      %p90 = por %p88, %p89
      %p92 = scmp.ne.s32.totalorder %s77, %s91
      %p93 = scmp.eq.s32.totalorder %s20, 0
      %p94 = por %p92, %p93
      %s96 = sadd.s32 %s95, 1
      %p99 = scmp.eq.s32.totalorder %s14, 1
      %p100 = scmp.ne.s32.totalorder %s95, %s97
      %p101 = scmp.eq.s32.totalorder %s14, 0
      %p102 = por %p100, %p101
      %p103 = scmp.ne.s32.totalorder %s95, %s97
      %p104 = scmp.eq.s32.totalorder %s19, 1
      %p105 = por %p103, %p104
      %p106 = scmp.ne.s32.totalorder %s97, %s98
      %p107 = scmp.eq.s32.totalorder %s19, 0
      %p108 = por %p106, %p107
      %p109 = scmp.ne.s32.totalorder %s97, %s98
      %p110 = scmp.eq.s32.totalorder %s20, 1
      %p111 = por %p109, %p110
      %p113 = scmp.ne.s32.totalorder %s98, %s112
      %p114 = scmp.eq.s32.totalorder %s20, 0
      %p115 = por %p113, %p114
      %s117 = sadd.s32 %s116, 1
      %p120 = scmp.eq.s32.totalorder %s14, 1
      %p121 = scmp.ne.s32.totalorder %s116, %s118
      %p122 = scmp.eq.s32.totalorder %s14, 0
      %p123 = por %p121, %p122
      %p124 = scmp.ne.s32.totalorder %s116, %s118
      %p125 = scmp.eq.s32.totalorder %s19, 1
      %p126 = por %p124, %p125
      %p127 = scmp.ne.s32.totalorder %s118, %s119
      %p128 = scmp.eq.s32.totalorder %s19, 0
      %p129 = por %p127, %p128
      %p130 = scmp.ne.s32.totalorder %s118, %s119
      %p131 = scmp.eq.s32.totalorder %s20, 1
      %p132 = por %p130, %p131
      %p134 = scmp.ne.s32.totalorder %s119, %s133
      %p135 = scmp.eq.s32.totalorder %s20, 0
      %p136 = por %p134, %p135
      %s137 = ssub.s32 %s14, %s21
      %p138 = scmp.eq.s32.totalorder %s137, 0
      %s140 = sadd.s32 %s139, 1
      %s141 = scalar_select %p138, %s139, %s140
      %p144 = pneg %p138
      %p145 = scmp.eq.s32.totalorder %s14, 1
      %p146 = por %p144, %p145
      %p147 = scmp.ne.s32.totalorder %s139, %s142
      %p148 = scmp.eq.s32.totalorder %s14, 0
      %p149 = por %p147, %p148
      %p150 = scmp.ne.s32.totalorder %s139, %s142
      %p151 = scmp.eq.s32.totalorder %s19, 1
      %p152 = por %p150, %p151
      %p153 = scmp.ne.s32.totalorder %s142, %s143
      %p154 = scmp.eq.s32.totalorder %s19, 0
      %p155 = por %p153, %p154
      %p156 = scmp.ne.s32.totalorder %s142, %s143
      %p157 = scmp.eq.s32.totalorder %s20, 1
      %p158 = por %p156, %p157
      %p160 = scmp.ne.s32.totalorder %s143, %s159
      %p161 = scmp.eq.s32.totalorder %s20, 0
      %p162 = por %p160, %p161
      %p163 = scmp.le.s32.totalorder 1, %s14
      %p164 = scmp.lt.s32.totalorder %s14, 3
      %p165 = pnand %p163, %p164
      %p166 = pneg %p165
      // Predicated region
      $region9: #{tpu_custom_call.1} parent=5 // pred_check
        _
      $region10: #{tpu_custom_call.1} parent=5 // pred_check_branch
        %168 = sbr.rel (%p165) target = $region12
      $region11: #{tpu_custom_call.1} parent=5 // pred_region
        %s169 = ssub.s32 %s14, 1
        // Predicated region
        $region13: #{tpu_custom_call.1} parent=11 // pred_check
          %p170 = pneg %p87
        $region14: #{tpu_custom_call.1} parent=11 // pred_check_branch
          %172 = sbr.rel (%p170) target = $region16
        $region15: #{tpu_custom_call.1} parent=11 // pred_region
          _
        $region16: #{tpu_custom_call.1} parent=11 // pred_fallthru
          _
        // Predicated region
        $region17: #{tpu_custom_call.1} parent=11 // pred_check
          %p173 = pneg %p108
        $region18: #{tpu_custom_call.1} parent=11 // pred_check_branch
          %175 = sbr.rel (%p173) target = $region20
        $region19: #{tpu_custom_call.1} parent=11 // pred_region
          _
        $region20: #{tpu_custom_call.1} parent=11 // pred_fallthru
          _
        // Predicated region
        $region21: #{tpu_custom_call.1} parent=11 // pred_check
          %p176 = pneg %p129
        $region22: #{tpu_custom_call.1} parent=11 // pred_check_branch
          %178 = sbr.rel (%p176) target = $region24
        $region23: #{tpu_custom_call.1} parent=11 // pred_region
          _
        $region24: #{tpu_custom_call.1} parent=11 // pred_fallthru
          _
      $region12: #{tpu_custom_call.1} parent=5 // pred_fallthru
        _
      %p179 = scmp.lt.s32.totalorder %s14, 2
      // Predicated region
      $region25: #{tpu_custom_call.1} parent=5 // pred_check
        %p180 = pneg %p179
      $region26: #{tpu_custom_call.1} parent=5 // pred_check_branch
        %182 = sbr.rel (%p180) target = $region28
      $region27: #{tpu_custom_call.1} parent=5 // pred_region
        // Predicated region
        $region29: #{tpu_custom_call.1} parent=27 // pred_check
          %p183 = pneg %p34
        $region30: #{tpu_custom_call.1} parent=27 // pred_check_branch
          %185 = sbr.rel (%p183) target = $region32
        $region31: #{tpu_custom_call.1} parent=27 // pred_region
          %s186 = smul.u32 16, %s14
          %p187 = scmp.lt.s32.totalorder %s186, 31
          %s188 = scalar_select %p187, %s186, 31
          %s189 = smul.addr %s188, 8
          %s190 = scalar_lea.vmem %s0, %s189
          %s191 = smul.u32 16, %s14
        $region32: #{tpu_custom_call.1} parent=27 // pred_fallthru
          _
        // Predicated region
        $region33: #{tpu_custom_call.1} parent=27 // pred_check
          %p192 = pneg %p60
        $region34: #{tpu_custom_call.1} parent=27 // pred_check_branch
          %194 = sbr.rel (%p192) target = $region36
        $region35: #{tpu_custom_call.1} parent=27 // pred_region
          %s195 = smul.u32 16, %s14
          %p196 = scmp.lt.s32.totalorder %s195, 31
          %s197 = scalar_select %p196, %s195, 31
          %s198 = smul.addr %s197, 8
          %s199 = scalar_lea.vmem %s1, %s198
          %s200 = smul.u32 16, %s14
        $region36: #{tpu_custom_call.1} parent=27 // pred_fallthru
          _
      $region28: #{tpu_custom_call.1} parent=5 // pred_fallthru
        _
      %p201 = scmp.le.s32.totalorder 1, %s14
      %p202 = scmp.lt.s32.totalorder %s14, 3
      %p203 = pnand %p201, %p202
      %p204 = pneg %p203
      // Predicated region
      $region37: #{tpu_custom_call.1} parent=5 // pred_check
        _
      $region38: #{tpu_custom_call.1} parent=5 // pred_check_branch
        %206 = sbr.rel (%p203) target = $region40
      $region39: #{tpu_custom_call.1} parent=5 // pred_region
        %s207 = ssub.s32 %s14, 1
        %s208 = smul.u32 16, %s19
        %p209 = scmp.lt.s32.totalorder %s208, 31
        %s210 = scalar_select %p209, %s208, 31
        %s211 = smul.addr %s210, 8
        %s212 = scalar_lea.vmem %s0, %s211
        %p213 = pneg %p40
        %p214 = pneg %p37
        %s215 = smul.u32 16, %s19
        %p216 = scmp.lt.s32.totalorder %s215, 31
        %s217 = scalar_select %p216, %s215, 31
        %s218 = smul.addr %s217, 8
        %s219 = scalar_lea.vmem %s1, %s218
        %p220 = pneg %p66
        %p221 = pneg %p63
        %p222 = pneg %p87
        %p223 = pneg %p84
        %p224 = pneg %p108
        %p225 = pneg %p105
        %p226 = pneg %p129
        %p227 = pneg %p126
        %p228 = pneg %p155
        %p229 = pneg %p152
        %s230 = sand.u32 %s142, 1
        %s231 = scalar_lea.sflag [#allocation3], %s230
        %s232 = sand.u32 %s142, 1
        %s233 = smul.addr %s232, 128
        %s234 = scalar_lea.vmem [#allocation2], %s233
        %s235 = smul.u32 16, %s19
        %p236 = scmp.lt.s32.totalorder %s235, 31
        %s237 = scalar_select %p236, %s235, 31
        %s238 = smul.addr %s237, 8
        %s239 = scalar_lea.vmem %s0, %s238
        %s240 = smul.u32 16, %s19
        %s241 = smul.u32 16, %s19
        %p242 = scmp.lt.s32.totalorder %s241, 31
        %s243 = scalar_select %p242, %s241, 31
        %s244 = smul.addr %s243, 8
        %s245 = scalar_lea.vmem %s1, %s244
        %s246 = smul.u32 16, %s19
        %s247 = smul.u32 16, %s19
        %v249 = vld [vmem:[%s239] sm:$0xff]
        %v250 = vld [vmem:[%s239 + $0x8] sm:$0xff]
        %v251 = vld [vmem:[%s239 + $0x10] sm:$0xff]
        %v252 = vld [vmem:[%s239 + $0x18] sm:$0xff]
        %v253 = vld [vmem:[%s239 + $0x20] sm:$0xff]
        %v254 = vld [vmem:[%s239 + $0x28] sm:$0xff]
        %v255 = vld [vmem:[%s239 + $0x30] sm:$0xff]
        %v256 = vld [vmem:[%s239 + $0x38] sm:$0xff]
        %v257 = vld [vmem:[%s239 + $0x40] sm:$0xff]
        %v258 = vld [vmem:[%s239 + $0x48] sm:$0xff]
        %v259 = vld [vmem:[%s239 + $0x50] sm:$0xff]
        %v260 = vld [vmem:[%s239 + $0x58] sm:$0xff]
        %v261 = vld [vmem:[%s239 + $0x60] sm:$0xff]
        %v262 = vld [vmem:[%s239 + $0x68] sm:$0xff]
        %v263 = vld [vmem:[%s239 + $0x70] sm:$0xff]
        %v264 = vld [vmem:[%s239 + $0x78] sm:$0xff]
        %v265 = vpack.c.bf16 %v250, %v249
        %v266 = vpack.c.bf16 %v252, %v251
        %v267 = vpack.c.bf16 %v254, %v253
        %v268 = vpack.c.bf16 %v256, %v255
        %v269 = vpack.c.bf16 %v258, %v257
        %v270 = vpack.c.bf16 %v260, %v259
        %v271 = vpack.c.bf16 %v262, %v261
        %v272 = vpack.c.bf16 %v264, %v263
        %v273 = vld [vmem:[%s245] sm:$0xff]
        %v274 = vld [vmem:[%s245 + $0x8] sm:$0xff]
        %v275 = vld [vmem:[%s245 + $0x10] sm:$0xff]
        %v276 = vld [vmem:[%s245 + $0x18] sm:$0xff]
        %v277 = vld [vmem:[%s245 + $0x20] sm:$0xff]
        %v278 = vld [vmem:[%s245 + $0x28] sm:$0xff]
        %v279 = vld [vmem:[%s245 + $0x30] sm:$0xff]
        %v280 = vld [vmem:[%s245 + $0x38] sm:$0xff]
        %v281 = vld [vmem:[%s245 + $0x40] sm:$0xff]
        %v282 = vld [vmem:[%s245 + $0x48] sm:$0xff]
        %v283 = vld [vmem:[%s245 + $0x50] sm:$0xff]
        %v284 = vld [vmem:[%s245 + $0x58] sm:$0xff]
        %v285 = vld [vmem:[%s245 + $0x60] sm:$0xff]
        %v286 = vld [vmem:[%s245 + $0x68] sm:$0xff]
        %v287 = vld [vmem:[%s245 + $0x70] sm:$0xff]
        %v288 = vld [vmem:[%s245 + $0x78] sm:$0xff]
        %v289 = vpack.c.bf16 %v274, %v273
        %v290 = vpack.c.bf16 %v276, %v275
        %v291 = vpack.c.bf16 %v278, %v277
        %v292 = vpack.c.bf16 %v280, %v279
        %v293 = vpack.c.bf16 %v282, %v281
        %v294 = vpack.c.bf16 %v284, %v283
        %v295 = vpack.c.bf16 %v286, %v285
        %v296 = vpack.c.bf16 %v288, %v287
        %v297 = vld [vmem:[%s2] sm:$0xf]
        %v298 = vld [vmem:[%s2 + $0x4] sm:$0xf]
        %v299 = vld [vmem:[%s2 + $0x8] sm:$0xf]
        %v300 = vld [vmem:[%s2 + $0xc] sm:$0xf]
        %v301 = vld [vmem:[%s2 + $0x10] sm:$0xf]
        %v302 = vld [vmem:[%s2 + $0x14] sm:$0xf]
        %v303 = vld [vmem:[%s2 + $0x18] sm:$0xf]
        %v304 = vld [vmem:[%s2 + $0x1c] sm:$0xf]
        %v305 = vld [vmem:[%s3] sm:$0xf]
        %v306 = vld [vmem:[%s3 + $0x4] sm:$0xf]
        %v307 = vld [vmem:[%s3 + $0x8] sm:$0xf]
        %v308 = vld [vmem:[%s3 + $0xc] sm:$0xf]
        %v309 = vld [vmem:[%s3 + $0x10] sm:$0xf]
        %v310 = vld [vmem:[%s3 + $0x14] sm:$0xf]
        %v311 = vld [vmem:[%s3 + $0x18] sm:$0xf]
        %v312 = vld [vmem:[%s3 + $0x1c] sm:$0xf]
        %v321 = vunpack.c.l.b16 %v305
        %v322 = vunpack.c.l.b16 %v306
        %v323 = vunpack.c.l.b16 %v307
        %v324 = vunpack.c.l.b16 %v308
        %v325 = vunpack.c.l.b16 %v309
        %v326 = vunpack.c.l.b16 %v310
        %v327 = vunpack.c.l.b16 %v311
        %v328 = vunpack.c.l.b16 %v312
        %v329 = vpack.c.b16 %v322, %v321
        %v330 = vpack.c.b16 %v324, %v323
        %v331 = vpack.c.b16 %v326, %v325
        %v332 = vpack.c.b16 %v328, %v327
        %vm337 = vcmask 523264
        %v339 = vsel %vm337, %v289, 0
        %v342 = vsel %vm337, %v290, 0
        %v345 = vsel %vm337, %v291, 0
        %v348 = vsel %vm337, %v292, 0
        %v351 = vsel %vm337, %v293, 0
        %v354 = vsel %vm337, %v294, 0
        %v357 = vsel %vm337, %v295, 0
        %v360 = vsel %vm337, %v296, 0
        %362 = vmatprep.subr.bf16.mxu0 0
        %363 = vmatpush1.bf16.msra.mxu0 %v329
        %364 = vmatprep.subr.bf16.mxu0 0
        %365 = vmatpush1.bf16.msra.mxu0 %v330
        %366 = vmatprep.subr.bf16.mxu0 0
        %367 = vmatpush1.bf16.msra.mxu0 %v331
        %368 = vmatprep.subr.bf16.mxu0 0
        %369 = vmatpush1.bf16.msra.mxu0 %v332
        %370 = vmatprep.subr.bf16.mxu0 0
        %371 = vmatpush1.bf16.msra.mxu0 0
        %372 = vmatprep.subr.bf16.mxu0 0
        %373 = vmatpush1.bf16.msra.mxu0 0
        %374 = vmatprep.subr.bf16.mxu0 0
        %375 = vmatpush1.bf16.msra.mxu0 0
        %376 = vmatprep.subr.bf16.mxu0 0
        %377 = vmatpush1.bf16.msra.mxu0 0
        %378 = vmatprep.subr.bf16.mxu0 0
        %379 = vmatpush1.bf16.msra.mxu0 0
        %380 = vmatprep.subr.bf16.mxu0 0
        %381 = vmatpush1.bf16.msra.mxu0 0
        %382 = vmatprep.subr.bf16.mxu0 0
        %383 = vmatpush1.bf16.msra.mxu0 0
        %384 = vmatprep.subr.bf16.mxu0 0
        %385 = vmatpush1.bf16.msra.mxu0 0
        %386 = vmatprep.subr.bf16.mxu0 0
        %387 = vmatpush1.bf16.msra.mxu0 0
        %388 = vmatprep.subr.bf16.mxu0 0
        %389 = vmatpush1.bf16.msra.mxu0 0
        %390 = vmatprep.subr.bf16.mxu0 0
        %391 = vmatpush1.bf16.msra.mxu0 0
        %392 = vmatprep.subr.bf16.mxu0 0
        %393 = vmatpush1.bf16.msra.mxu0 0
        %394 = vmatprep.mubr.bf16.mxu0 0
        %395 = vmatmul.mubr.bf16.gmra.mrb[0].mxu0 %v339
        %v396 = vpop.f32.mrb[0].mxu0
        %v397 = vadd.f32 0.0, %v396
        %v398 = vpop.f32.mrb[0].mxu0
        %v399 = vpop.f32.mrb[0].mxu0
        %v400 = vadd.f32 0.0, %v399
        %v401 = vpop.f32.mrb[0].mxu0
        %402 = vmatprep.mubr.bf16.mxu0 0
        %403 = vmatmul.mubr.bf16.gmra.mrb[0].mxu0 %v342
        %v404 = vpop.f32.mrb[0].mxu0
        %v405 = vadd.f32 0.0, %v404
        %v406 = vpop.f32.mrb[0].mxu0
        %v407 = vpop.f32.mrb[0].mxu0
        %v408 = vadd.f32 0.0, %v407
        %v409 = vpop.f32.mrb[0].mxu0
        %410 = vmatprep.mubr.bf16.mxu0 0
        %411 = vmatmul.mubr.bf16.gmra.mrb[0].mxu0 %v345
        %v412 = vpop.f32.mrb[0].mxu0
        %v413 = vadd.f32 0.0, %v412
        %v414 = vpop.f32.mrb[0].mxu0
        %v415 = vpop.f32.mrb[0].mxu0
        %v416 = vadd.f32 0.0, %v415
        %v417 = vpop.f32.mrb[0].mxu0
        %418 = vmatprep.mubr.bf16.mxu0 0
        %419 = vmatmul.mubr.bf16.gmra.mrb[0].mxu0 %v348
        %v420 = vpop.f32.mrb[0].mxu0
        %v421 = vadd.f32 0.0, %v420
        %v422 = vpop.f32.mrb[0].mxu0
        %v423 = vpop.f32.mrb[0].mxu0
        %v424 = vadd.f32 0.0, %v423
        %v425 = vpop.f32.mrb[0].mxu0
        %426 = vmatprep.mubr.bf16.mxu0 0
        %427 = vmatmul.mubr.bf16.gmra.mrb[0].mxu0 %v351
        %v428 = vpop.f32.mrb[0].mxu0
        %v429 = vadd.f32 0.0, %v428
        %v430 = vpop.f32.mrb[0].mxu0
        %v431 = vpop.f32.mrb[0].mxu0
        %v432 = vadd.f32 0.0, %v431
        %v433 = vpop.f32.mrb[0].mxu0
        %434 = vmatprep.mubr.bf16.mxu0 0
        %435 = vmatmul.mubr.bf16.gmra.mrb[0].mxu0 %v354
        %v436 = vpop.f32.mrb[0].mxu0
        %v437 = vadd.f32 0.0, %v436
        %v438 = vpop.f32.mrb[0].mxu0
        %v439 = vpop.f32.mrb[0].mxu0
        %v440 = vadd.f32 0.0, %v439
        %v441 = vpop.f32.mrb[0].mxu0
        %442 = vmatprep.mubr.bf16.mxu0 0
        %443 = vmatmul.mubr.bf16.gmra.mrb[0].mxu0 %v357
        %v444 = vpop.f32.mrb[0].mxu0
        %v445 = vadd.f32 0.0, %v444
        %v446 = vpop.f32.mrb[0].mxu0
        %v447 = vpop.f32.mrb[0].mxu0
        %v448 = vadd.f32 0.0, %v447
        %v449 = vpop.f32.mrb[0].mxu0
        %450 = vmatprep.mubr.bf16.mxu0 0
        %451 = vmatmul.mubr.bf16.gmra.mrb[0].mxu0 %v360
        %v452 = vpop.f32.mrb[0].mxu0
        %v453 = vadd.f32 0.0, %v452
        %v454 = vpop.f32.mrb[0].mxu0
        %v455 = vpop.f32.mrb[0].mxu0
        %v456 = vadd.f32 0.0, %v455
        %v457 = vpop.f32.mrb[0].mxu0
        %458 = vdwg.mxu0
        %v467 = vunpack.c.l.b16 %v297
        %v468 = vunpack.c.l.b16 %v298
        %v469 = vunpack.c.l.b16 %v299
        %v470 = vunpack.c.l.b16 %v300
        %v471 = vunpack.c.l.b16 %v301
        %v472 = vunpack.c.l.b16 %v302
        %v473 = vunpack.c.l.b16 %v303
        %v474 = vunpack.c.l.b16 %v304
        %v475 = vpack.c.b16 %v468, %v467
        %v476 = vpack.c.b16 %v470, %v469
        %v477 = vpack.c.b16 %v472, %v471
        %v478 = vpack.c.b16 %v474, %v473
        %v484 = vsel %vm337, %v265, 0
        %v487 = vsel %vm337, %v266, 0
        %v490 = vsel %vm337, %v267, 0
        %v493 = vsel %vm337, %v268, 0
        %v496 = vsel %vm337, %v269, 0
        %v499 = vsel %vm337, %v270, 0
        %v502 = vsel %vm337, %v271, 0
        %v505 = vsel %vm337, %v272, 0
        %507 = vmatprep.subr.bf16.mxu0 0
        %508 = vmatpush1.bf16.msra.mxu0 %v475
        %509 = vmatprep.subr.bf16.mxu0 0
        %510 = vmatpush1.bf16.msra.mxu0 %v476
        %511 = vmatprep.subr.bf16.mxu0 0
        %512 = vmatpush1.bf16.msra.mxu0 %v477
        %513 = vmatprep.subr.bf16.mxu0 0
        %514 = vmatpush1.bf16.msra.mxu0 %v478
        %515 = vmatprep.subr.bf16.mxu0 0
        %516 = vmatpush1.bf16.msra.mxu0 0
        %517 = vmatprep.subr.bf16.mxu0 0
        %518 = vmatpush1.bf16.msra.mxu0 0
        %519 = vmatprep.subr.bf16.mxu0 0
        %520 = vmatpush1.bf16.msra.mxu0 0
        %521 = vmatprep.subr.bf16.mxu0 0
        %522 = vmatpush1.bf16.msra.mxu0 0
        %523 = vmatprep.subr.bf16.mxu0 0
        %524 = vmatpush1.bf16.msra.mxu0 0
        %525 = vmatprep.subr.bf16.mxu0 0
        %526 = vmatpush1.bf16.msra.mxu0 0
        %527 = vmatprep.subr.bf16.mxu0 0
        %528 = vmatpush1.bf16.msra.mxu0 0
        %529 = vmatprep.subr.bf16.mxu0 0
        %530 = vmatpush1.bf16.msra.mxu0 0
        %531 = vmatprep.subr.bf16.mxu0 0
        %532 = vmatpush1.bf16.msra.mxu0 0
        %533 = vmatprep.subr.bf16.mxu0 0
        %534 = vmatpush1.bf16.msra.mxu0 0
        %535 = vmatprep.subr.bf16.mxu0 0
        %536 = vmatpush1.bf16.msra.mxu0 0
        %537 = vmatprep.subr.bf16.mxu0 0
        %538 = vmatpush1.bf16.msra.mxu0 0
        %539 = vmatprep.mubr.bf16.mxu0 0
        %540 = vmatmul.mubr.bf16.gmra.mrb[0].mxu0 %v484
        %v541 = vpop.f32.mrb[0].mxu0
        %v542 = vadd.f32 %v397, %v541
        %v543 = vpop.f32.mrb[0].mxu0
        %v544 = vpop.f32.mrb[0].mxu0
        %v545 = vadd.f32 %v400, %v544
        %v546 = vpop.f32.mrb[0].mxu0
        %547 = vmatprep.mubr.bf16.mxu0 0
        %548 = vmatmul.mubr.bf16.gmra.mrb[0].mxu0 %v487
        %v549 = vpop.f32.mrb[0].mxu0
        %v550 = vadd.f32 %v405, %v549
        %v551 = vpop.f32.mrb[0].mxu0
        %v552 = vpop.f32.mrb[0].mxu0
        %v553 = vadd.f32 %v408, %v552
        %v554 = vpop.f32.mrb[0].mxu0
        %555 = vmatprep.mubr.bf16.mxu0 0
        %556 = vmatmul.mubr.bf16.gmra.mrb[0].mxu0 %v490
        %v557 = vpop.f32.mrb[0].mxu0
        %v558 = vadd.f32 %v413, %v557
        %v559 = vpop.f32.mrb[0].mxu0
        %v560 = vpop.f32.mrb[0].mxu0
        %v561 = vadd.f32 %v416, %v560
        %v562 = vpop.f32.mrb[0].mxu0
        %563 = vmatprep.mubr.bf16.mxu0 0
        %564 = vmatmul.mubr.bf16.gmra.mrb[0].mxu0 %v493
        %v565 = vpop.f32.mrb[0].mxu0
        %v566 = vadd.f32 %v421, %v565
        %v567 = vpop.f32.mrb[0].mxu0
        %v568 = vpop.f32.mrb[0].mxu0
        %v569 = vadd.f32 %v424, %v568
        %v570 = vpop.f32.mrb[0].mxu0
        %571 = vmatprep.mubr.bf16.mxu0 0
        %572 = vmatmul.mubr.bf16.gmra.mrb[0].mxu0 %v496
        %v573 = vpop.f32.mrb[0].mxu0
        %v574 = vadd.f32 %v429, %v573
        %v575 = vpop.f32.mrb[0].mxu0
        %v576 = vpop.f32.mrb[0].mxu0
        %v577 = vadd.f32 %v432, %v576
        %v578 = vpop.f32.mrb[0].mxu0
        %579 = vmatprep.mubr.bf16.mxu0 0
        %580 = vmatmul.mubr.bf16.gmra.mrb[0].mxu0 %v499
        %v581 = vpop.f32.mrb[0].mxu0
        %v582 = vadd.f32 %v437, %v581
        %v583 = vpop.f32.mrb[0].mxu0
        %v584 = vpop.f32.mrb[0].mxu0
        %v585 = vadd.f32 %v440, %v584
        %v586 = vpop.f32.mrb[0].mxu0
        %587 = vmatprep.mubr.bf16.mxu0 0
        %588 = vmatmul.mubr.bf16.gmra.mrb[0].mxu0 %v502
        %v589 = vpop.f32.mrb[0].mxu0
        %v590 = vadd.f32 %v445, %v589
        %v591 = vpop.f32.mrb[0].mxu0
        %v592 = vpop.f32.mrb[0].mxu0
        %v593 = vadd.f32 %v448, %v592
        %v594 = vpop.f32.mrb[0].mxu0
        %595 = vmatprep.mubr.bf16.mxu0 0
        %596 = vmatmul.mubr.bf16.gmra.mrb[0].mxu0 %v505
        %v597 = vpop.f32.mrb[0].mxu0
        %v598 = vadd.f32 %v453, %v597
        %v599 = vpop.f32.mrb[0].mxu0
        %v600 = vpop.f32.mrb[0].mxu0
        %v601 = vadd.f32 %v456, %v600
        %v602 = vpop.f32.mrb[0].mxu0
        %603 = vdwg.mxu0
        %v604 = vld [vmem:[%s4] sm:$0x1]
        %v606 = vlaneseq
        %v607 = vshrl.u32 %v606, 7
        %v608 = vsub.s32 0, %v607
        %v609 = vrot.slane %v604, %v608
        %v611 = vadd.f32 %v542, %v609
        %v612 = vadd.f32 %v545, %v609
        %v613 = vadd.f32 %v550, %v609
        %v614 = vadd.f32 %v553, %v609
        %v615 = vadd.f32 %v558, %v609
        %v616 = vadd.f32 %v561, %v609
        %v617 = vadd.f32 %v566, %v609
        %v618 = vadd.f32 %v569, %v609
        %v619 = vadd.f32 %v574, %v609
        %v620 = vadd.f32 %v577, %v609
        %v621 = vadd.f32 %v582, %v609
        %v622 = vadd.f32 %v585, %v609
        %v623 = vadd.f32 %v590, %v609
        %v624 = vadd.f32 %v593, %v609
        %v625 = vadd.f32 %v598, %v609
        %v626 = vadd.f32 %v601, %v609
        %627 = vst [vmem:[%s234] sm:$0xff] %v611
        %628 = vst [vmem:[%s234 + $0x8] sm:$0xff] %v612
        %629 = vst [vmem:[%s234 + $0x10] sm:$0xff] %v613
        %630 = vst [vmem:[%s234 + $0x18] sm:$0xff] %v614
        %631 = vst [vmem:[%s234 + $0x20] sm:$0xff] %v615
        %632 = vst [vmem:[%s234 + $0x28] sm:$0xff] %v616
        %633 = vst [vmem:[%s234 + $0x30] sm:$0xff] %v617
        %634 = vst [vmem:[%s234 + $0x38] sm:$0xff] %v618
        %635 = vst [vmem:[%s234 + $0x40] sm:$0xff] %v619
        %636 = vst [vmem:[%s234 + $0x48] sm:$0xff] %v620
        %637 = vst [vmem:[%s234 + $0x50] sm:$0xff] %v621
        %638 = vst [vmem:[%s234 + $0x58] sm:$0xff] %v622
        %639 = vst [vmem:[%s234 + $0x60] sm:$0xff] %v623
        %640 = vst [vmem:[%s234 + $0x68] sm:$0xff] %v624
        %641 = vst [vmem:[%s234 + $0x70] sm:$0xff] %v625
        %642 = vst [vmem:[%s234 + $0x78] sm:$0xff] %v626
        %s643 = sand.u32 %s142, 1
        %s644 = scalar_lea.sflag [#allocation3], %s643
        %s645 = sand.u32 %s142, 1
        %s646 = smul.addr %s645, 128
        %s647 = scalar_lea.vmem [#allocation2], %s646
        // Predicated region
        $region41: #{tpu_custom_call.1} parent=39 // pred_check
          %p648 = pneg %p152
        $region42: #{tpu_custom_call.1} parent=39 // pred_check_branch
          %650 = sbr.rel (%p648) target = $region44
        $region43: #{tpu_custom_call.1} parent=39 // pred_region
          %s651 = smul.u32 16, %s19
          %s653 = ssub.s32 2048, 2048
          %654 = vsyncadd %s644, %s653
          %s655 = smul.addr %s651, 128
          %s656 = scalar_lea.hbm %s5, %s655
          %s657 = sshll.u32 %s647, 4
          %s658 = int_to_ptr.vmem [resolvable:$true] %s657
          %663 = dma.vmem_to_hbm [thread:$0]  %s658, 2048, %s656, %s644, 128, 128, 8
        $region44: #{tpu_custom_call.1} parent=39 // pred_fallthru
          _
      $region40: #{tpu_custom_call.1} parent=5 // pred_fallthru
        _
      %p664 = scmp.le.s32.totalorder 2, %s14
      // Predicated region
      $region45: #{tpu_custom_call.1} parent=5 // pred_check
        %p665 = pneg %p664
      $region46: #{tpu_custom_call.1} parent=5 // pred_check_branch
        %667 = sbr.rel (%p665) target = $region48
      $region47: #{tpu_custom_call.1} parent=5 // pred_region
        %s668 = ssub.s32 %s14, 2
        // Predicated region
        $region49: #{tpu_custom_call.1} parent=47 // pred_check
          %p669 = pneg %p158
        $region50: #{tpu_custom_call.1} parent=47 // pred_check_branch
          %671 = sbr.rel (%p669) target = $region52
        $region51: #{tpu_custom_call.1} parent=47 // pred_region
          %s672 = sand.u32 %s143, 1
          %s673 = scalar_lea.sflag [#allocation3], %s672
          %s674 = sand.u32 %s143, 1
          %s675 = smul.addr %s674, 128
          %s676 = scalar_lea.vmem [#allocation2], %s675
          %677 = dma.done %s673, 2048
        $region52: #{tpu_custom_call.1} parent=47 // pred_fallthru
          _
      $region48: #{tpu_custom_call.1} parent=5 // pred_fallthru
        _
    $region6: #{tpu_custom_call.1} parent=1 // loop_footer
      %s18 = sadd.s32 1, %s14
    $region7: #{tpu_custom_call.1} parent=1 // loop_footer_branch
      %13 = sbr.rel target = $region3
    $region8: #{tpu_custom_call.1} parent=1 // loop_exit
      _
    %678 = vsyncpa [#allocation3], 1
    %s679 = scalar_lea.sflag [#allocation3], 1
    %680 = vsyncpa %s679, 1

</llo_original>
